<compile_context>
chip_gen: v6e
topology: v6e:2x2x1
jax: 0.10.0
libtpu: 0.0.40
codegen_flags: <defaults>
</compile_context>

<pallas_src>
import itertools

import numpy as np
import jax
import jax.numpy as jnp
from jax import lax
from jax.experimental import pallas as pl
from jax.experimental.pallas import tpu as pltpu

BUCKET_BINS = [0, 1, 2, 3, 4, 5, 7, 8, 15, 16, 31, 32, 63, 64]


def _bucket(width: int) -> int:
    # PyTorch: [ix for ix, v in enumerate(bucket_bins) if width >= v][-1]
    return max(ix for ix, v in enumerate(BUCKET_BINS) if width >= v)


def _min_distance(a, b, c, d):
    return min(abs(b - c), abs(a - d))


def _round_up(x: int, m: int) -> int:
    return ((x + m - 1) // m) * m


def _pair_kernel(spans_ref,    # VMEM (Bc, S, D)            batch-chunk of spans
                 onehot_ref,   # VMEM (Bc, 2*P_pad, S)      one-hot row selectors
                 demb_ref,     # VMEM (Bc, P_pad, W_pad)    pre-gathered, pre-padded
                 out_ref):     # VMEM (Bc, P_pad, F_pad)    lane-dense output block
    p_pad = demb_ref.shape[1]
    sel = onehot_ref[...].astype(jnp.float32)
    sp = spans_ref[...].astype(jnp.float32)
    # One-hot gather of all target rows and opinion rows of the chunk in a single
    # batched MXU matmul. f32 accumulation + HIGHEST precision => exact selection.
    g = jnp.einsum(
        "bps,bsd->bpd", sel, sp,
        preferred_element_type=jnp.float32,
        precision=lax.Precision.HIGHEST,
    )                                                   # (Bc, 2*P_pad, D)
    rows_t = g[:, :p_pad, :]                            # (Bc, P_pad, D)
    rows_o = g[:, p_pad:, :]                            # (Bc, P_pad, D)
    # Single whole-block concat (lane placement amortized over all P rows) and one
    # dense, unmasked full-width store.
    assembled = jnp.concatenate(
        [rows_t, rows_o, demb_ref[...].astype(jnp.float32)], axis=-1)
    out_ref[...] = assembled.astype(out_ref.dtype)


def pair_representation(spans, span_indices, label_lst, target_indices,
                        opinion_indices, distance_embeddings,
                        dep_emb=None, triplet_use_dep=False):
    """spans: (B, S, D) float; distance_embeddings: (14, W) float.

    Returns (pair_repr (B, P, 2D+W), candidate_indices, relation_indices) matching
    PairRepresentation.forward for the triplet_use_dep=False path.
    """
    del label_lst, dep_emb  # only used by the (untranslated) dep path
    if triplet_use_dep:
        # TODO(synk): dep path (triplet_R construction + dep_emb averaging) not ported.
        raise NotImplementedError("triplet_use_dep=True path not implemented")

    B, S, D = spans.shape
    _, W = distance_embeddings.shape

    # ---- host-side index bookkeeping (pure Python, identical to the torch loops) ----
    relation_indices, candidate_indices = [], []
    for bb in range(B):
        pairs = list(itertools.product(list(target_indices[bb]),
                                       list(opinion_indices[bb])))
        relation_indices.append(pairs)
        for (t, o) in pairs:
            a, b_ = span_indices[t]
            c, d = span_indices[o]
            candidate_indices.append((a, b_, c, d))

    P = len(relation_indices[0])
    assert all(len(r) == P for r in relation_indices), \
        "torch.stack(candidate_pool) requires equal pair counts per batch"

    t_idx = np.zeros((B, P), np.int32)
    o_idx = np.zeros((B, P), np.int32)
    buckets = np.zeros((B, P), np.int32)
    for bb in range(B):
        for p, (t, o) in enumerate(relation_indices[bb]):
            a, b_ = span_indices[t]
            c, d = span_indices[o]
            t_idx[bb, p] = t
            o_idx[bb, p] = o
            buckets[bb, p] = _bucket(_min_distance(a, b_, c, d))

    # torch.cat promotion semantics for the output dtype.
    out_dtype = jnp.promote_types(spans.dtype, distance_embeddings.dtype)

    # ---- padded, lane-dense layout -------------------------------------------------
    F = 2 * D + W
    P_pad = _round_up(P, 8)            # sublane-aligned rows
    F_pad = _round_up(F, 128)          # lane-dense output width
    W_pad = F_pad - 2 * D              # demb tail already carries the lane padding

    # Two parallel batch chunks when B >= 2 (keeps both v7x TCs busy); a single
    # step when B == 1. v5e/v6e pay at most 2 per-step pipeline overheads.
    num_chunks = 1 if B == 1 else 2
    Bp = _round_up(B, num_chunks)
    Bc = Bp // num_chunks

    # One-hot selectors for target rows (rows [0, P)) and opinion rows
    # (rows [P_pad, P_pad + P)); padding rows stay all-zero -> zero output rows.
    onehot = np.zeros((B, 2 * P_pad, S), np.float32)
    b_rep = np.repeat(np.arange(B), P)
    p_rep = np.tile(np.arange(P), B)
    onehot[b_rep, p_rep, t_idx.reshape(-1)] = 1.0
    onehot[b_rep, P_pad + p_rep, o_idx.reshape(-1)] = 1.0
    if Bp > B:
        onehot = np.pad(onehot, ((0, Bp - B), (0, 0), (0, 0)))
    onehot = jnp.asarray(onehot)

    # Distance-bucket embeddings pre-gathered (static indices) and pre-padded into
    # the [2D, F_pad) lane range of the output.
    demb = distance_embeddings[jnp.asarray(buckets)].astype(out_dtype)   # (B, P, W)
    demb = jnp.pad(demb, ((0, Bp - B), (0, P_pad - P), (0, W_pad - W)))

    spans_p = spans if Bp == B else jnp.pad(spans, ((0, Bp - B), (0, 0), (0, 0)))

    out_full = pl.pallas_call(
        _pair_kernel,
        out_shape=jax.ShapeDtypeStruct((Bp, P_pad, F_pad), out_dtype),
        grid=(num_chunks,),
        in_specs=[
            pl.BlockSpec((Bc, S, D), lambda i: (i, 0, 0)),
            pl.BlockSpec((Bc, 2 * P_pad, S), lambda i: (i, 0, 0)),
            pl.BlockSpec((Bc, P_pad, W_pad), lambda i: (i, 0, 0)),
        ],
        out_specs=pl.BlockSpec((Bc, P_pad, F_pad), lambda i: (i, 0, 0)),
        compiler_params=pltpu.CompilerParams(
            dimension_semantics=("parallel",)),   # batch chunks independent
    )(spans_p, onehot, demb)

    out = out_full[:B, :P, :F]
    return out, candidate_indices, relation_indices


if __name__ == "__main__":
    key = jax.random.PRNGKey(0)
    B = 2          # batch
    L = 8          # sequence length (only used to enumerate span_indices)
    span_max = 4   # span_maximum_length
    D = 32         # span representation dim (spans.size(-1))
    W = 32         # args.triplet_distance_dim

    # sliding-window span_indices, same enumeration SpanRepresentation produces
    span_indices = []
    for window in range(1, min(L, span_max) + 1):
        for i in range(L - window + 1):
            span_indices.append((i, i + window))
    S = len(span_indices)          # 26 spans
    label_lst = [0] * S

    # per-batch target / opinion span ids (equal pair counts, as torch.stack requires)
    target_indices = [[0, 3, 9], [1, 7, 20]]
    opinion_indices = [[5, 14], [2, 25]]

    k1, k2 = jax.random.split(key)
    spans = jax.random.normal(k1, (B, S, D), dtype=jnp.float32)
    distance_embeddings = jax.random.normal(
        k2, (len(BUCKET_BINS), W), dtype=jnp.float32)

    out, candidate_indices, relation_indices = pair_representation(
        spans, span_indices, label_lst, target_indices, opinion_indices,
        distance_embeddings)
    out = jax.block_until_ready(out)

    # pure-JAX reference of the PyTorch forward (triplet_use_dep=False path)
    ref_pool = []
    for bb in range(B):
        rows = []
        for (t, o) in relation_indices[bb]:
            a, b_ = span_indices[t]
            c, d = span_indices[o]
            wvec = distance_embeddings[_bucket(_min_distance(a, b_, c, d))]
            rows.append(jnp.concatenate(
                [spans[bb, t, :], spans[bb, o, :], wvec], axis=0))
        ref_pool.append(jnp.stack(rows))
    ref = jnp.stack(ref_pool)

    np.testing.assert_allclose(np.asarray(out), np.asarray(ref),
                               rtol=1e-6, atol=1e-6)
    assert out.shape == (B, len(relation_indices[0]), 2 * D + W)
    assert len(candidate_indices) == B * len(relation_indices[0])
    print("KERNEL_OK")
</pallas_src>

<mosaic_0001>
module attributes {stable_mosaic.version = 11 : i64} {
  func.func @_pair_kernel(%arg0: i32, %arg1: memref<1x26x32xf32, #tpu.memory_space<vmem>>, %arg2: memref<1x16x26xf32, #tpu.memory_space<vmem>>, %arg3: memref<1x8x64xf32, #tpu.memory_space<vmem>>, %arg4: memref<1x8x128xf32, #tpu.memory_space<vmem>>) attributes {dimension_semantics = [#tpu.dimension_semantics<parallel>], iteration_bounds = array<i64: 2>, scalar_prefetch = 0 : i64, scratch_operands = 0 : i64, tpu.core_type = #tpu.core_type<tc>, window_params = [{transform_indices = @transform_0, window_bounds = array<i64: 1, 26, 32>}, {transform_indices = @transform_1, window_bounds = array<i64: 1, 16, 26>}, {transform_indices = @transform_2, window_bounds = array<i64: 1, 8, 64>}, {transform_indices = @transform_3, window_bounds = array<i64: 1, 8, 128>}]} {
    %c0 = arith.constant 0 : index
    %c0_0 = arith.constant 0 : index
    %c0_1 = arith.constant 0 : index
    %0 = vector.load %arg2[%c0, %c0_0, %c0_1] : memref<1x16x26xf32, #tpu.memory_space<vmem>>, vector<1x16x26xf32>
    %c0_2 = arith.constant 0 : index
    %c0_3 = arith.constant 0 : index
    %c0_4 = arith.constant 0 : index
    %1 = vector.load %arg1[%c0_2, %c0_3, %c0_4] : memref<1x26x32xf32, #tpu.memory_space<vmem>>, vector<1x26x32xf32>
    "tpu.trace_start"() <{level = 10 : i32, message = "bps,bsd->bpd"}> : () -> ()
    %cst = arith.constant dense<0.000000e+00> : vector<1x16x32xf32>
    %2 = tpu.matmul %0, %1, %cst {dimension_numbers = #tpu.dot_dimension_numbers<[2], [1], [1], [2], [0, 0, 0, 1, 1, 2], [0], [0]>, precision = #tpu.contract_precision<fp32>} : vector<1x16x26xf32>, vector<1x26x32xf32>, vector<1x16x32xf32> -> vector<1x16x32xf32>
    "tpu.trace_stop"() : () -> ()
    %3 = vector.extract_strided_slice %2 {offsets = [0, 0, 0], sizes = [1, 8, 32], strides = [1, 1, 1]} : vector<1x16x32xf32> to vector<1x8x32xf32>
    %4 = vector.extract_strided_slice %2 {offsets = [0, 8, 0], sizes = [1, 8, 32], strides = [1, 1, 1]} : vector<1x16x32xf32> to vector<1x8x32xf32>
    %c0_5 = arith.constant 0 : index
    %c0_6 = arith.constant 0 : index
    %c0_7 = arith.constant 0 : index
    %5 = vector.load %arg3[%c0_5, %c0_6, %c0_7] : memref<1x8x64xf32, #tpu.memory_space<vmem>>, vector<1x8x64xf32>
    %6 = tpu.concatenate %3, %4, %5 in 2 : vector<1x8x32xf32>, vector<1x8x32xf32>, vector<1x8x64xf32> -> vector<1x8x128xf32>
    %c0_8 = arith.constant 0 : index
    %c0_9 = arith.constant 0 : index
    %c0_10 = arith.constant 0 : index
    %7 = vector.load %arg4[%c0_8, %c0_9, %c0_10] : memref<1x8x128xf32, #tpu.memory_space<vmem>>, vector<1x8x128xf32>
    tpu.vector_store %arg4[%c0_8, %c0_9, %c0_10], %6 {strides = array<i32>} : memref<1x8x128xf32, #tpu.memory_space<vmem>>, vector<1x8x128xf32>,
    return
  }
  func.func @transform_0(%arg0: i32) -> (i32, i32, i32) {
    %c0_i32 = arith.constant 0 : i32
    %c0_i32_0 = arith.constant 0 : i32
    %c0_i32_1 = arith.constant 0 : i32
    return %arg0, %c0_i32, %c0_i32_0 : i32, i32, i32
  }
  func.func @transform_1(%arg0: i32) -> (i32, i32, i32) {
    %c0_i32 = arith.constant 0 : i32
    %c0_i32_0 = arith.constant 0 : i32
    %c0_i32_1 = arith.constant 0 : i32
    return %arg0, %c0_i32, %c0_i32_0 : i32, i32, i32
  }
  func.func @transform_2(%arg0: i32) -> (i32, i32, i32) {
    %c0_i32 = arith.constant 0 : i32
    %c0_i32_0 = arith.constant 0 : i32
    %c0_i32_1 = arith.constant 0 : i32
    return %arg0, %c0_i32, %c0_i32_0 : i32, i32, i32
  }
  func.func @transform_3(%arg0: i32) -> (i32, i32, i32) {
    %c0_i32 = arith.constant 0 : i32
    %c0_i32_0 = arith.constant 0 : i32
    %c0_i32_1 = arith.constant 0 : i32
    return %arg0, %c0_i32, %c0_i32_0 : i32, i32, i32
  }
}

</mosaic_0001>

<llo_original>
// kernel: tpu_custom_call.1
$region0: #{tpu_custom_call.1}
  #allocation0 [shape = 'u32[]', space=smem, size = 0x4, offset = 0x4, fixed_abs, tag = 'smem constant byte address 0x4 - core index']
  #allocation1 [shape = 'u32[144,128]{1,0:T(1,128)}', space=vmem, size = 0x12000, scoped, tag = 'internal scratch']
  %s0 = inlined_call_operand.vmem [shape: f32[2,26,32], index: 0, kind: input, shape index: {}]
  %s1 = inlined_call_operand.vmem [shape: f32[2,16,26], index: 1, kind: input, shape index: {}]
  %s2 = inlined_call_operand.vmem [shape: f32[2,8,64], index: 2, kind: input, shape index: {}]
  %s3 = inlined_call_operand.hbm [shape: f32[2,8,128], index: 3, kind: output, shape index: {}]
  %s4 = sld [smem:[#allocation0]]
  $region45: #{tpu_custom_call.1} parent=0
    _
  %s6 = ssub.s32 1, %s4
  %s7 = scalar_select 0, %s6, %s4
  $region1: #{tpu_custom_call.1} parent=0
    #allocation2 [shape = 'u8[8192]{0}', space=vmem, size = 0x2000, scoped, tag = 'output window, operand 0']
    #allocation3 [shape = 's32[2]{0}', space=sflag, size = 0x8, scoped, tag = 'scoped memory for tpu_custom_call.1']
    %8 = vsyncpa [#allocation3], 0
    %s9 = scalar_lea.sflag [#allocation3], 1
    %10 = vsyncpa %s9, 0
    loop: start=0, step=1, limit=4
    $region2: #{tpu_custom_call.1} parent=1 // loop_pre_header
      _
    $region3: #{tpu_custom_call.1} parent=1 // loop_header
      %s12 = sphi 0, %s16
      %p13 = scmp.ge.s32.totalorder %s12, 4
      %s22 = sphi 0, %s24
      %s25 = sphi 0, %s22
      %s26 = sphi 0, %s25
      %s42 = sphi 0, %s26
      %s48 = sphi 0, %s50
      %s51 = sphi 0, %s48
      %s52 = sphi 0, %s51
      %s68 = sphi 0, %s52
      %s74 = sphi 0, %s76
      %s77 = sphi 0, %s74
      %s78 = sphi 0, %s77
      %s94 = sphi 0, %s78
      %s100 = sphi 0, %s102
      %s103 = sphi 0, %s100
      %s104 = sphi 0, %s103
      %s120 = sphi 0, %s104
    $region4: #{tpu_custom_call.1} parent=1 // loop_header_branch
      %15 = sbr.rel (%p13) target = $region8
    $region5: #{tpu_custom_call.1} parent=1 // loop_body
      %s17 = ssub.s32 %s12, 1
      %s18 = ssub.s32 %s12, 2
      %s19 = sadd.s32 %s12, 1
      %s20 = ssub.s32 %s12, %s19
      %p21 = scmp.eq.s32.totalorder %s20, 0
      %s23 = sadd.s32 %s22, 1
      %s24 = scalar_select %p21, %s22, %s23
      %p27 = pneg %p21
      %p28 = scmp.eq.s32.totalorder %s12, 1
      %p29 = por %p27, %p28
      %p30 = scmp.ne.s32.totalorder %s22, %s25
      %p31 = scmp.eq.s32.totalorder %s12, 0
      %p32 = por %p30, %p31
      %p33 = scmp.ne.s32.totalorder %s22, %s25
      %p34 = scmp.eq.s32.totalorder %s17, 1
      %p35 = por %p33, %p34
      %p36 = scmp.ne.s32.totalorder %s25, %s26
      %p37 = scmp.eq.s32.totalorder %s17, 0
      %p38 = por %p36, %p37
      %p39 = scmp.ne.s32.totalorder %s25, %s26
      %p40 = scmp.eq.s32.totalorder %s18, 1
      %p41 = por %p39, %p40
      %p43 = scmp.ne.s32.totalorder %s26, %s42
      %p44 = scmp.eq.s32.totalorder %s18, 0
      %p45 = por %p43, %p44
      %s46 = ssub.s32 %s12, %s19
      %p47 = scmp.eq.s32.totalorder %s46, 0
      %s49 = sadd.s32 %s48, 1
      %s50 = scalar_select %p47, %s48, %s49
      %p53 = pneg %p47
      %p54 = scmp.eq.s32.totalorder %s12, 1
      %p55 = por %p53, %p54
      %p56 = scmp.ne.s32.totalorder %s48, %s51
      %p57 = scmp.eq.s32.totalorder %s12, 0
      %p58 = por %p56, %p57
      %p59 = scmp.ne.s32.totalorder %s48, %s51
      %p60 = scmp.eq.s32.totalorder %s17, 1
      %p61 = por %p59, %p60
      %p62 = scmp.ne.s32.totalorder %s51, %s52
      %p63 = scmp.eq.s32.totalorder %s17, 0
      %p64 = por %p62, %p63
      %p65 = scmp.ne.s32.totalorder %s51, %s52
      %p66 = scmp.eq.s32.totalorder %s18, 1
      %p67 = por %p65, %p66
      %p69 = scmp.ne.s32.totalorder %s52, %s68
      %p70 = scmp.eq.s32.totalorder %s18, 0
      %p71 = por %p69, %p70
      %s72 = ssub.s32 %s12, %s19
      %p73 = scmp.eq.s32.totalorder %s72, 0
      %s75 = sadd.s32 %s74, 1
      %s76 = scalar_select %p73, %s74, %s75
      %p79 = pneg %p73
      %p80 = scmp.eq.s32.totalorder %s12, 1
      %p81 = por %p79, %p80
      %p82 = scmp.ne.s32.totalorder %s74, %s77
      %p83 = scmp.eq.s32.totalorder %s12, 0
      %p84 = por %p82, %p83
      %p85 = scmp.ne.s32.totalorder %s74, %s77
      %p86 = scmp.eq.s32.totalorder %s17, 1
      %p87 = por %p85, %p86
      %p88 = scmp.ne.s32.totalorder %s77, %s78
      %p89 = scmp.eq.s32.totalorder %s17, 0
      %p90 = por %p88, %p89
      %p91 = scmp.ne.s32.totalorder %s77, %s78
      %p92 = scmp.eq.s32.totalorder %s18, 1
      %p93 = por %p91, %p92
      %p95 = scmp.ne.s32.totalorder %s78, %s94
      %p96 = scmp.eq.s32.totalorder %s18, 0
      %p97 = por %p95, %p96
      %s98 = ssub.s32 %s12, %s19
      %p99 = scmp.eq.s32.totalorder %s98, 0
      %s101 = sadd.s32 %s100, 1
      %s102 = scalar_select %p99, %s100, %s101
      %p105 = pneg %p99
      %p106 = scmp.eq.s32.totalorder %s12, 1
      %p107 = por %p105, %p106
      %p108 = scmp.ne.s32.totalorder %s100, %s103
      %p109 = scmp.eq.s32.totalorder %s12, 0
      %p110 = por %p108, %p109
      %p111 = scmp.ne.s32.totalorder %s100, %s103
      %p112 = scmp.eq.s32.totalorder %s17, 1
      %p113 = por %p111, %p112
      %p114 = scmp.ne.s32.totalorder %s103, %s104
      %p115 = scmp.eq.s32.totalorder %s17, 0
      %p116 = por %p114, %p115
      %p117 = scmp.ne.s32.totalorder %s103, %s104
      %p118 = scmp.eq.s32.totalorder %s18, 1
      %p119 = por %p117, %p118
      %p121 = scmp.ne.s32.totalorder %s104, %s120
      %p122 = scmp.eq.s32.totalorder %s18, 0
      %p123 = por %p121, %p122
      %p124 = scmp.le.s32.totalorder 1, %s12
      %p125 = scmp.lt.s32.totalorder %s12, 3
      %p126 = pnand %p124, %p125
      %p127 = pneg %p126
      // Predicated region
      $region9: #{tpu_custom_call.1} parent=5 // pred_check
        _
      $region10: #{tpu_custom_call.1} parent=5 // pred_check_branch
        %129 = sbr.rel (%p126) target = $region12
      $region11: #{tpu_custom_call.1} parent=5 // pred_region
        %s130 = ssub.s32 %s12, 1
      $region12: #{tpu_custom_call.1} parent=5 // pred_fallthru
        _
      %p131 = scmp.lt.s32.totalorder %s12, 2
      // Predicated region
      $region13: #{tpu_custom_call.1} parent=5 // pred_check
        %p132 = pneg %p131
      $region14: #{tpu_custom_call.1} parent=5 // pred_check_branch
        %134 = sbr.rel (%p132) target = $region16
      $region15: #{tpu_custom_call.1} parent=5 // pred_region
        // Predicated region
        $region17: #{tpu_custom_call.1} parent=15 // pred_check
          %p135 = pneg %p32
        $region18: #{tpu_custom_call.1} parent=15 // pred_check_branch
          %137 = sbr.rel (%p135) target = $region20
        $region19: #{tpu_custom_call.1} parent=15 // pred_region
          %p138 = scmp.lt.s32.totalorder %s12, 1
          %s139 = scalar_select %p138, %s12, 1
          %s140 = smul.addr %s139, 4
          %s141 = smul.addr %s140, 8
          %s142 = scalar_lea.vmem %s0, %s141
        $region20: #{tpu_custom_call.1} parent=15 // pred_fallthru
          _
        // Predicated region
        $region21: #{tpu_custom_call.1} parent=15 // pred_check
          %p143 = pneg %p58
        $region22: #{tpu_custom_call.1} parent=15 // pred_check_branch
          %145 = sbr.rel (%p143) target = $region24
        $region23: #{tpu_custom_call.1} parent=15 // pred_region
          %p146 = scmp.lt.s32.totalorder %s12, 1
          %s147 = scalar_select %p146, %s12, 1
          %s148 = smul.addr %s147, 2
          %s149 = smul.addr %s148, 8
          %s150 = scalar_lea.vmem %s1, %s149
        $region24: #{tpu_custom_call.1} parent=15 // pred_fallthru
          _
        // Predicated region
        $region25: #{tpu_custom_call.1} parent=15 // pred_check
          %p151 = pneg %p84
        $region26: #{tpu_custom_call.1} parent=15 // pred_check_branch
          %153 = sbr.rel (%p151) target = $region28
        $region27: #{tpu_custom_call.1} parent=15 // pred_region
          %p154 = scmp.lt.s32.totalorder %s12, 1
          %s155 = scalar_select %p154, %s12, 1
          %s156 = smul.addr %s155, 8
          %s157 = scalar_lea.vmem %s2, %s156
        $region28: #{tpu_custom_call.1} parent=15 // pred_fallthru
          _
      $region16: #{tpu_custom_call.1} parent=5 // pred_fallthru
        _
      %p158 = scmp.le.s32.totalorder 1, %s12
      %p159 = scmp.lt.s32.totalorder %s12, 3
      %p160 = pnand %p158, %p159
      %p161 = pneg %p160
      // Predicated region
      $region29: #{tpu_custom_call.1} parent=5 // pred_check
        _
      $region30: #{tpu_custom_call.1} parent=5 // pred_check_branch
        %163 = sbr.rel (%p160) target = $region32
      $region31: #{tpu_custom_call.1} parent=5 // pred_region
        %s164 = ssub.s32 %s12, 1
        %p165 = scmp.lt.s32.totalorder %s17, 1
        %s166 = scalar_select %p165, %s17, 1
        %s167 = smul.addr %s166, 4
        %s168 = smul.addr %s167, 8
        %s169 = scalar_lea.vmem %s0, %s168
        %p170 = pneg %p38
        %p171 = pneg %p35
        %p172 = scmp.lt.s32.totalorder %s17, 1
        %s173 = scalar_select %p172, %s17, 1
        %s174 = smul.addr %s173, 2
        %s175 = smul.addr %s174, 8
        %s176 = scalar_lea.vmem %s1, %s175
        %p177 = pneg %p64
        %p178 = pneg %p61
        %p179 = scmp.lt.s32.totalorder %s17, 1
        %s180 = scalar_select %p179, %s17, 1
        %s181 = smul.addr %s180, 8
        %s182 = scalar_lea.vmem %s2, %s181
        %p183 = pneg %p90
        %p184 = pneg %p87
        %p185 = pneg %p116
        %p186 = pneg %p113
        %s187 = sand.u32 %s103, 1
        %s188 = scalar_lea.sflag [#allocation3], %s187
        %s189 = sand.u32 %s103, 1
        %s190 = smul.addr %s189, 8
        %s191 = scalar_lea.vmem [#allocation2], %s190
        %p192 = scmp.lt.s32.totalorder %s17, 1
        %s193 = scalar_select %p192, %s17, 1
        %s194 = smul.addr %s193, 4
        %s195 = smul.addr %s194, 8
        %s196 = scalar_lea.vmem %s0, %s195
        %p197 = scmp.lt.s32.totalorder %s17, 1
        %s198 = scalar_select %p197, %s17, 1
        %s199 = smul.addr %s198, 2
        %s200 = smul.addr %s199, 8
        %s201 = scalar_lea.vmem %s1, %s200
        %p202 = scmp.lt.s32.totalorder %s17, 1
        %s203 = scalar_select %p202, %s17, 1
        %s204 = smul.addr %s203, 8
        %s205 = scalar_lea.vmem %s2, %s204
        %v206 = vld [vmem:[%s201] sm:$0xff]
        %v207 = vld [vmem:[%s201 + $0x8] sm:$0xff]
        %v208 = vld [vmem:[%s196] sm:$0xff]
        %v209 = vld [vmem:[%s196 + $0x8] sm:$0xff]
        %v210 = vld [vmem:[%s196 + $0x10] sm:$0xff]
        %v211 = vld [vmem:[%s196 + $0x18] sm:$0x3]
        %vm212 = vcmask 211968
        %v214 = vsel %vm212, %v206, 0
        %v217 = vsel %vm212, %v207, 0
        %vm219 = vcmask 1041408
        %v221 = vsel %vm219, %v211, 0
        %223 = vmatprep.subr.mxu0 0.0
        %224 = vmatpush1.msra.mxu0 0.0
        %225 = vmatprep.subr.mxu0 0.0
        %226 = vmatpush1.msra.mxu0 0.0
        %227 = vmatprep.subr.mxu0 0.0
        %228 = vmatpush1.msra.mxu0 0.0
        %229 = vmatprep.subr.mxu0 0.0
        %230 = vmatpush1.msra.mxu0 0.0
        %231 = vmatprep.subr.mxu0 0.0
        %232 = vmatpush1.msra.mxu0 0.0
        %233 = vmatprep.subr.mxu0 0.0
        %234 = vmatpush1.msra.mxu0 0.0
        %235 = vmatprep.subr.mxu0 0.0
        %236 = vmatpush1.msra.mxu0 0.0
        %237 = vmatprep.subr.mxu0 0.0
        %238 = vmatpush1.msra.mxu0 0.0
        %239 = vmatprep.subr.mxu0 0.0
        %240 = vmatpush1.msra.mxu0 0.0
        %241 = vmatprep.subr.mxu0 0.0
        %242 = vmatpush1.msra.mxu0 0.0
        %243 = vmatprep.subr.mxu0 0.0
        %244 = vmatpush1.msra.mxu0 0.0
        %245 = vmatprep.subr.mxu0 0.0
        %246 = vmatpush1.msra.mxu0 0.0
        %247 = vmatprep.subr.mxu0 0.0
        %v248 = vand.u32 %v221, 4294901760
        %249 = vmatpush1.msra.mxu0 %v248
        %250 = vmatprep.subr.mxu0 0.0
        %v251 = vand.u32 %v210, 4294901760
        %252 = vmatpush1.msra.mxu0 %v251
        %253 = vmatprep.subr.mxu0 0.0
        %v254 = vand.u32 %v209, 4294901760
        %255 = vmatpush1.msra.mxu0 %v254
        %256 = vmatprep.subr.mxu0 0.0
        %v257 = vand.u32 %v208, 4294901760
        %258 = vmatpush1.msra.mxu0 %v257
        %259 = vmatprep.subr.mxu0 0.0
        %260 = vmatpush2.msra.mxu0 0.0
        %261 = vmatprep.subr.mxu0 0.0
        %262 = vmatpush2.msra.mxu0 0.0
        %263 = vmatprep.subr.mxu0 0.0
        %264 = vmatpush2.msra.mxu0 0.0
        %265 = vmatprep.subr.mxu0 0.0
        %266 = vmatpush2.msra.mxu0 0.0
        %267 = vmatprep.subr.mxu0 0.0
        %268 = vmatpush2.msra.mxu0 0.0
        %269 = vmatprep.subr.mxu0 0.0
        %270 = vmatpush2.msra.mxu0 0.0
        %271 = vmatprep.subr.mxu0 0.0
        %272 = vmatpush2.msra.mxu0 0.0
        %273 = vmatprep.subr.mxu0 0.0
        %274 = vmatpush2.msra.mxu0 0.0
        %275 = vmatprep.subr.mxu0 0.0
        %276 = vmatpush2.msra.mxu0 0.0
        %277 = vmatprep.subr.mxu0 0.0
        %278 = vmatpush2.msra.mxu0 0.0
        %279 = vmatprep.subr.mxu0 0.0
        %280 = vmatpush2.msra.mxu0 0.0
        %281 = vmatprep.subr.mxu0 0.0
        %282 = vmatpush2.msra.mxu0 0.0
        %283 = vmatprep.subr.mxu0 0.0
        %284 = vmatpush2.msra.mxu0 0.0
        %285 = vmatprep.subr.mxu0 0.0
        %286 = vmatpush2.msra.mxu0 0.0
        %287 = vmatprep.subr.mxu0 0.0
        %288 = vmatpush2.msra.mxu0 0.0
        %289 = vmatprep.subr.mxu0 0.0
        %290 = vmatpush2.msra.mxu0 0.0
        %291 = vmatprep.mubr.f32.mxu0 0.0
        %v292 = vand.u32 %v214, 4294901760
        %v293 = vsub.f32 %v214, %v292
        %v294 = vand.u32 %v293, 4294901760
        %v295 = vsub.f32 %v293, %v294
        %v296 = vand.u32 %v295, 4294901760
        %297 = vmatmul.mubr.f32.gmra.mxu0 %v296
        %v298 = vpop.f32.mrf.mxu0
        %v299 = vadd.f32 0.0, %v298
        %v300 = vpop.f32.mrf.mxu0
        %301 = vmatprep.mubr.f32.mxu0 0.0
        %v302 = vand.u32 %v217, 4294901760
        %v303 = vsub.f32 %v217, %v302
        %v304 = vand.u32 %v303, 4294901760
        %v305 = vsub.f32 %v303, %v304
        %v306 = vand.u32 %v305, 4294901760
        %307 = vmatmul.mubr.f32.gmra.mxu0 %v306
        %v308 = vpop.f32.mrf.mxu0
        %v309 = vadd.f32 0.0, %v308
        %v310 = vpop.f32.mrf.mxu0
        %311 = vdwg.mxu0
        %312 = vmatprep.subr.mxu0 0.0
        %313 = vmatpush1.msra.mxu0 0.0
        %314 = vmatprep.subr.mxu0 0.0
        %315 = vmatpush1.msra.mxu0 0.0
        %316 = vmatprep.subr.mxu0 0.0
        %317 = vmatpush1.msra.mxu0 0.0
        %318 = vmatprep.subr.mxu0 0.0
        %319 = vmatpush1.msra.mxu0 0.0
        %320 = vmatprep.subr.mxu0 0.0
        %321 = vmatpush1.msra.mxu0 0.0
        %322 = vmatprep.subr.mxu0 0.0
        %323 = vmatpush1.msra.mxu0 0.0
        %324 = vmatprep.subr.mxu0 0.0
        %325 = vmatpush1.msra.mxu0 0.0
        %326 = vmatprep.subr.mxu0 0.0
        %327 = vmatpush1.msra.mxu0 0.0
        %328 = vmatprep.subr.mxu0 0.0
        %329 = vmatpush1.msra.mxu0 0.0
        %330 = vmatprep.subr.mxu0 0.0
        %331 = vmatpush1.msra.mxu0 0.0
        %332 = vmatprep.subr.mxu0 0.0
        %333 = vmatpush1.msra.mxu0 0.0
        %334 = vmatprep.subr.mxu0 0.0
        %335 = vmatpush1.msra.mxu0 0.0
        %336 = vmatprep.subr.mxu0 0.0
        %v337 = vand.u32 %v221, 4294901760
        %v338 = vsub.f32 %v221, %v337
        %v339 = vand.u32 %v338, 4294901760
        %v340 = vsub.f32 %v338, %v339
        %v341 = vand.u32 %v340, 4294901760
        %342 = vmatpush1.msra.mxu0 %v341
        %343 = vmatprep.subr.mxu0 0.0
        %v344 = vand.u32 %v210, 4294901760
        %v345 = vsub.f32 %v210, %v344
        %v346 = vand.u32 %v345, 4294901760
        %v347 = vsub.f32 %v345, %v346
        %v348 = vand.u32 %v347, 4294901760
        %349 = vmatpush1.msra.mxu0 %v348
        %350 = vmatprep.subr.mxu0 0.0
        %v351 = vand.u32 %v209, 4294901760
        %v352 = vsub.f32 %v209, %v351
        %v353 = vand.u32 %v352, 4294901760
        %v354 = vsub.f32 %v352, %v353
        %v355 = vand.u32 %v354, 4294901760
        %356 = vmatpush1.msra.mxu0 %v355
        %357 = vmatprep.subr.mxu0 0.0
        %v358 = vand.u32 %v208, 4294901760
        %v359 = vsub.f32 %v208, %v358
        %v360 = vand.u32 %v359, 4294901760
        %v361 = vsub.f32 %v359, %v360
        %v362 = vand.u32 %v361, 4294901760
        %363 = vmatpush1.msra.mxu0 %v362
        %364 = vmatprep.subr.mxu0 0.0
        %365 = vmatpush2.msra.mxu0 0.0
        %366 = vmatprep.subr.mxu0 0.0
        %367 = vmatpush2.msra.mxu0 0.0
        %368 = vmatprep.subr.mxu0 0.0
        %369 = vmatpush2.msra.mxu0 0.0
        %370 = vmatprep.subr.mxu0 0.0
        %371 = vmatpush2.msra.mxu0 0.0
        %372 = vmatprep.subr.mxu0 0.0
        %373 = vmatpush2.msra.mxu0 0.0
        %374 = vmatprep.subr.mxu0 0.0
        %375 = vmatpush2.msra.mxu0 0.0
        %376 = vmatprep.subr.mxu0 0.0
        %377 = vmatpush2.msra.mxu0 0.0
        %378 = vmatprep.subr.mxu0 0.0
        %379 = vmatpush2.msra.mxu0 0.0
        %380 = vmatprep.subr.mxu0 0.0
        %381 = vmatpush2.msra.mxu0 0.0
        %382 = vmatprep.subr.mxu0 0.0
        %383 = vmatpush2.msra.mxu0 0.0
        %384 = vmatprep.subr.mxu0 0.0
        %385 = vmatpush2.msra.mxu0 0.0
        %386 = vmatprep.subr.mxu0 0.0
        %387 = vmatpush2.msra.mxu0 0.0
        %388 = vmatprep.subr.mxu0 0.0
        %389 = vmatpush2.msra.mxu0 0.0
        %390 = vmatprep.subr.mxu0 0.0
        %391 = vmatpush2.msra.mxu0 0.0
        %392 = vmatprep.subr.mxu0 0.0
        %393 = vmatpush2.msra.mxu0 0.0
        %394 = vmatprep.subr.mxu0 0.0
        %395 = vmatpush2.msra.mxu0 0.0
        %396 = vmatprep.mubr.f32.mxu0 0.0
        %v397 = vand.u32 %v214, 4294901760
        %398 = vmatmul.mubr.f32.gmra.mxu0 %v397
        %v399 = vpop.f32.mrf.mxu0
        %v400 = vadd.f32 %v299, %v399
        %v401 = vpop.f32.mrf.mxu0
        %402 = vmatprep.mubr.f32.mxu0 0.0
        %v403 = vand.u32 %v217, 4294901760
        %404 = vmatmul.mubr.f32.gmra.mxu0 %v403
        %v405 = vpop.f32.mrf.mxu0
        %v406 = vadd.f32 %v309, %v405
        %v407 = vpop.f32.mrf.mxu0
        %408 = vdwg.mxu0
        %409 = vmatprep.subr.mxu0 0.0
        %410 = vmatpush1.msra.mxu0 0.0
        %411 = vmatprep.subr.mxu0 0.0
        %412 = vmatpush1.msra.mxu0 0.0
        %413 = vmatprep.subr.mxu0 0.0
        %414 = vmatpush1.msra.mxu0 0.0
        %415 = vmatprep.subr.mxu0 0.0
        %416 = vmatpush1.msra.mxu0 0.0
        %417 = vmatprep.subr.mxu0 0.0
        %418 = vmatpush1.msra.mxu0 0.0
        %419 = vmatprep.subr.mxu0 0.0
        %420 = vmatpush1.msra.mxu0 0.0
        %421 = vmatprep.subr.mxu0 0.0
        %422 = vmatpush1.msra.mxu0 0.0
        %423 = vmatprep.subr.mxu0 0.0
        %424 = vmatpush1.msra.mxu0 0.0
        %425 = vmatprep.subr.mxu0 0.0
        %426 = vmatpush1.msra.mxu0 0.0
        %427 = vmatprep.subr.mxu0 0.0
        %428 = vmatpush1.msra.mxu0 0.0
        %429 = vmatprep.subr.mxu0 0.0
        %430 = vmatpush1.msra.mxu0 0.0
        %431 = vmatprep.subr.mxu0 0.0
        %432 = vmatpush1.msra.mxu0 0.0
        %433 = vmatprep.subr.mxu0 0.0
        %v434 = vand.u32 %v221, 4294901760
        %v435 = vsub.f32 %v221, %v434
        %436 = vmatpush1.msra.mxu0 %v435
        %437 = vmatprep.subr.mxu0 0.0
        %v438 = vand.u32 %v210, 4294901760
        %v439 = vsub.f32 %v210, %v438
        %440 = vmatpush1.msra.mxu0 %v439
        %441 = vmatprep.subr.mxu0 0.0
        %v442 = vand.u32 %v209, 4294901760
        %v443 = vsub.f32 %v209, %v442
        %444 = vmatpush1.msra.mxu0 %v443
        %445 = vmatprep.subr.mxu0 0.0
        %v446 = vand.u32 %v208, 4294901760
        %v447 = vsub.f32 %v208, %v446
        %448 = vmatpush1.msra.mxu0 %v447
        %449 = vmatprep.subr.mxu0 0.0
        %450 = vmatpush2.msra.mxu0 0.0
        %451 = vmatprep.subr.mxu0 0.0
        %452 = vmatpush2.msra.mxu0 0.0
        %453 = vmatprep.subr.mxu0 0.0
        %454 = vmatpush2.msra.mxu0 0.0
        %455 = vmatprep.subr.mxu0 0.0
        %456 = vmatpush2.msra.mxu0 0.0
        %457 = vmatprep.subr.mxu0 0.0
        %458 = vmatpush2.msra.mxu0 0.0
        %459 = vmatprep.subr.mxu0 0.0
        %460 = vmatpush2.msra.mxu0 0.0
        %461 = vmatprep.subr.mxu0 0.0
        %462 = vmatpush2.msra.mxu0 0.0
        %463 = vmatprep.subr.mxu0 0.0
        %464 = vmatpush2.msra.mxu0 0.0
        %465 = vmatprep.subr.mxu0 0.0
        %466 = vmatpush2.msra.mxu0 0.0
        %467 = vmatprep.subr.mxu0 0.0
        %468 = vmatpush2.msra.mxu0 0.0
        %469 = vmatprep.subr.mxu0 0.0
        %470 = vmatpush2.msra.mxu0 0.0
        %471 = vmatprep.subr.mxu0 0.0
        %472 = vmatpush2.msra.mxu0 0.0
        %473 = vmatprep.subr.mxu0 0.0
        %474 = vmatpush2.msra.mxu0 0.0
        %475 = vmatprep.subr.mxu0 0.0
        %476 = vmatpush2.msra.mxu0 0.0
        %477 = vmatprep.subr.mxu0 0.0
        %478 = vmatpush2.msra.mxu0 0.0
        %479 = vmatprep.subr.mxu0 0.0
        %480 = vmatpush2.msra.mxu0 0.0
        %481 = vmatprep.mubr.f32.mxu0 0.0
        %v482 = vand.u32 %v214, 4294901760
        %v483 = vsub.f32 %v214, %v482
        %484 = vmatmul.mubr.f32.gmra.mxu0 %v483
        %v485 = vpop.f32.mrf.mxu0
        %v486 = vadd.f32 %v400, %v485
        %v487 = vpop.f32.mrf.mxu0
        %488 = vmatprep.mubr.f32.mxu0 0.0
        %v489 = vand.u32 %v217, 4294901760
        %v490 = vsub.f32 %v217, %v489
        %491 = vmatmul.mubr.f32.gmra.mxu0 %v490
        %v492 = vpop.f32.mrf.mxu0
        %v493 = vadd.f32 %v406, %v492
        %v494 = vpop.f32.mrf.mxu0
        %495 = vdwg.mxu0
        %496 = vmatprep.subr.mxu0 0.0
        %497 = vmatpush1.msra.mxu0 0.0
        %498 = vmatprep.subr.mxu0 0.0
        %499 = vmatpush1.msra.mxu0 0.0
        %500 = vmatprep.subr.mxu0 0.0
        %501 = vmatpush1.msra.mxu0 0.0
        %502 = vmatprep.subr.mxu0 0.0
        %503 = vmatpush1.msra.mxu0 0.0
        %504 = vmatprep.subr.mxu0 0.0
        %505 = vmatpush1.msra.mxu0 0.0
        %506 = vmatprep.subr.mxu0 0.0
        %507 = vmatpush1.msra.mxu0 0.0
        %508 = vmatprep.subr.mxu0 0.0
        %509 = vmatpush1.msra.mxu0 0.0
        %510 = vmatprep.subr.mxu0 0.0
        %511 = vmatpush1.msra.mxu0 0.0
        %512 = vmatprep.subr.mxu0 0.0
        %513 = vmatpush1.msra.mxu0 0.0
        %514 = vmatprep.subr.mxu0 0.0
        %515 = vmatpush1.msra.mxu0 0.0
        %516 = vmatprep.subr.mxu0 0.0
        %517 = vmatpush1.msra.mxu0 0.0
        %518 = vmatprep.subr.mxu0 0.0
        %519 = vmatpush1.msra.mxu0 0.0
        %520 = vmatprep.subr.mxu0 0.0
        %v521 = vand.u32 %v221, 4294901760
        %522 = vmatpush1.msra.mxu0 %v521
        %523 = vmatprep.subr.mxu0 0.0
        %v524 = vand.u32 %v210, 4294901760
        %525 = vmatpush1.msra.mxu0 %v524
        %526 = vmatprep.subr.mxu0 0.0
        %v527 = vand.u32 %v209, 4294901760
        %528 = vmatpush1.msra.mxu0 %v527
        %529 = vmatprep.subr.mxu0 0.0
        %v530 = vand.u32 %v208, 4294901760
        %531 = vmatpush1.msra.mxu0 %v530
        %532 = vmatprep.subr.mxu0 0.0
        %533 = vmatpush2.msra.mxu0 0.0
        %534 = vmatprep.subr.mxu0 0.0
        %535 = vmatpush2.msra.mxu0 0.0
        %536 = vmatprep.subr.mxu0 0.0
        %537 = vmatpush2.msra.mxu0 0.0
        %538 = vmatprep.subr.mxu0 0.0
        %539 = vmatpush2.msra.mxu0 0.0
        %540 = vmatprep.subr.mxu0 0.0
        %541 = vmatpush2.msra.mxu0 0.0
        %542 = vmatprep.subr.mxu0 0.0
        %543 = vmatpush2.msra.mxu0 0.0
        %544 = vmatprep.subr.mxu0 0.0
        %545 = vmatpush2.msra.mxu0 0.0
        %546 = vmatprep.subr.mxu0 0.0
        %547 = vmatpush2.msra.mxu0 0.0
        %548 = vmatprep.subr.mxu0 0.0
        %549 = vmatpush2.msra.mxu0 0.0
        %550 = vmatprep.subr.mxu0 0.0
        %551 = vmatpush2.msra.mxu0 0.0
        %552 = vmatprep.subr.mxu0 0.0
        %553 = vmatpush2.msra.mxu0 0.0
        %554 = vmatprep.subr.mxu0 0.0
        %555 = vmatpush2.msra.mxu0 0.0
        %556 = vmatprep.subr.mxu0 0.0
        %557 = vmatpush2.msra.mxu0 0.0
        %558 = vmatprep.subr.mxu0 0.0
        %559 = vmatpush2.msra.mxu0 0.0
        %560 = vmatprep.subr.mxu0 0.0
        %561 = vmatpush2.msra.mxu0 0.0
        %562 = vmatprep.subr.mxu0 0.0
        %563 = vmatpush2.msra.mxu0 0.0
        %564 = vmatprep.mubr.f32.mxu0 0.0
        %v565 = vand.u32 %v214, 4294901760
        %v566 = vsub.f32 %v214, %v565
        %v567 = vand.u32 %v566, 4294901760
        %568 = vmatmul.mubr.f32.gmra.mxu0 %v567
        %v569 = vpop.f32.mrf.mxu0
        %v570 = vadd.f32 %v486, %v569
        %v571 = vpop.f32.mrf.mxu0
        %572 = vmatprep.mubr.f32.mxu0 0.0
        %v573 = vand.u32 %v217, 4294901760
        %v574 = vsub.f32 %v217, %v573
        %v575 = vand.u32 %v574, 4294901760
        %576 = vmatmul.mubr.f32.gmra.mxu0 %v575
        %v577 = vpop.f32.mrf.mxu0
        %v578 = vadd.f32 %v493, %v577
        %v579 = vpop.f32.mrf.mxu0
        %580 = vdwg.mxu0
        %581 = vmatprep.subr.mxu0 0.0
        %582 = vmatpush1.msra.mxu0 0.0
        %583 = vmatprep.subr.mxu0 0.0
        %584 = vmatpush1.msra.mxu0 0.0
        %585 = vmatprep.subr.mxu0 0.0
        %586 = vmatpush1.msra.mxu0 0.0
        %587 = vmatprep.subr.mxu0 0.0
        %588 = vmatpush1.msra.mxu0 0.0
        %589 = vmatprep.subr.mxu0 0.0
        %590 = vmatpush1.msra.mxu0 0.0
        %591 = vmatprep.subr.mxu0 0.0
        %592 = vmatpush1.msra.mxu0 0.0
        %593 = vmatprep.subr.mxu0 0.0
        %594 = vmatpush1.msra.mxu0 0.0
        %595 = vmatprep.subr.mxu0 0.0
        %596 = vmatpush1.msra.mxu0 0.0
        %597 = vmatprep.subr.mxu0 0.0
        %598 = vmatpush1.msra.mxu0 0.0
        %599 = vmatprep.subr.mxu0 0.0
        %600 = vmatpush1.msra.mxu0 0.0
        %601 = vmatprep.subr.mxu0 0.0
        %602 = vmatpush1.msra.mxu0 0.0
        %603 = vmatprep.subr.mxu0 0.0
        %604 = vmatpush1.msra.mxu0 0.0
        %605 = vmatprep.subr.mxu0 0.0
        %v606 = vand.u32 %v221, 4294901760
        %v607 = vsub.f32 %v221, %v606
        %v608 = vand.u32 %v607, 4294901760
        %609 = vmatpush1.msra.mxu0 %v608
        %610 = vmatprep.subr.mxu0 0.0
        %v611 = vand.u32 %v210, 4294901760
        %v612 = vsub.f32 %v210, %v611
        %v613 = vand.u32 %v612, 4294901760
        %614 = vmatpush1.msra.mxu0 %v613
        %615 = vmatprep.subr.mxu0 0.0
        %v616 = vand.u32 %v209, 4294901760
        %v617 = vsub.f32 %v209, %v616
        %v618 = vand.u32 %v617, 4294901760
        %619 = vmatpush1.msra.mxu0 %v618
        %620 = vmatprep.subr.mxu0 0.0
        %v621 = vand.u32 %v208, 4294901760
        %v622 = vsub.f32 %v208, %v621
        %v623 = vand.u32 %v622, 4294901760
        %624 = vmatpush1.msra.mxu0 %v623
        %625 = vmatprep.subr.mxu0 0.0
        %626 = vmatpush2.msra.mxu0 0.0
        %627 = vmatprep.subr.mxu0 0.0
        %628 = vmatpush2.msra.mxu0 0.0
        %629 = vmatprep.subr.mxu0 0.0
        %630 = vmatpush2.msra.mxu0 0.0
        %631 = vmatprep.subr.mxu0 0.0
        %632 = vmatpush2.msra.mxu0 0.0
        %633 = vmatprep.subr.mxu0 0.0
        %634 = vmatpush2.msra.mxu0 0.0
        %635 = vmatprep.subr.mxu0 0.0
        %636 = vmatpush2.msra.mxu0 0.0
        %637 = vmatprep.subr.mxu0 0.0
        %638 = vmatpush2.msra.mxu0 0.0
        %639 = vmatprep.subr.mxu0 0.0
        %640 = vmatpush2.msra.mxu0 0.0
        %641 = vmatprep.subr.mxu0 0.0
        %642 = vmatpush2.msra.mxu0 0.0
        %643 = vmatprep.subr.mxu0 0.0
        %644 = vmatpush2.msra.mxu0 0.0
        %645 = vmatprep.subr.mxu0 0.0
        %646 = vmatpush2.msra.mxu0 0.0
        %647 = vmatprep.subr.mxu0 0.0
        %648 = vmatpush2.msra.mxu0 0.0
        %649 = vmatprep.subr.mxu0 0.0
        %650 = vmatpush2.msra.mxu0 0.0
        %651 = vmatprep.subr.mxu0 0.0
        %652 = vmatpush2.msra.mxu0 0.0
        %653 = vmatprep.subr.mxu0 0.0
        %654 = vmatpush2.msra.mxu0 0.0
        %655 = vmatprep.subr.mxu0 0.0
        %656 = vmatpush2.msra.mxu0 0.0
        %657 = vmatprep.mubr.f32.mxu0 0.0
        %v658 = vand.u32 %v214, 4294901760
        %659 = vmatmul.mubr.f32.gmra.mxu0 %v658
        %v660 = vpop.f32.mrf.mxu0
        %v661 = vadd.f32 %v570, %v660
        %v662 = vpop.f32.mrf.mxu0
        %663 = vmatprep.mubr.f32.mxu0 0.0
        %v664 = vand.u32 %v217, 4294901760
        %665 = vmatmul.mubr.f32.gmra.mxu0 %v664
        %v666 = vpop.f32.mrf.mxu0
        %v667 = vadd.f32 %v578, %v666
        %v668 = vpop.f32.mrf.mxu0
        %669 = vdwg.mxu0
        %670 = vmatprep.subr.mxu0 0.0
        %671 = vmatpush1.msra.mxu0 0.0
        %672 = vmatprep.subr.mxu0 0.0
        %673 = vmatpush1.msra.mxu0 0.0
        %674 = vmatprep.subr.mxu0 0.0
        %675 = vmatpush1.msra.mxu0 0.0
        %676 = vmatprep.subr.mxu0 0.0
        %677 = vmatpush1.msra.mxu0 0.0
        %678 = vmatprep.subr.mxu0 0.0
        %679 = vmatpush1.msra.mxu0 0.0
        %680 = vmatprep.subr.mxu0 0.0
        %681 = vmatpush1.msra.mxu0 0.0
        %682 = vmatprep.subr.mxu0 0.0
        %683 = vmatpush1.msra.mxu0 0.0
        %684 = vmatprep.subr.mxu0 0.0
        %685 = vmatpush1.msra.mxu0 0.0
        %686 = vmatprep.subr.mxu0 0.0
        %687 = vmatpush1.msra.mxu0 0.0
        %688 = vmatprep.subr.mxu0 0.0
        %689 = vmatpush1.msra.mxu0 0.0
        %690 = vmatprep.subr.mxu0 0.0
        %691 = vmatpush1.msra.mxu0 0.0
        %692 = vmatprep.subr.mxu0 0.0
        %693 = vmatpush1.msra.mxu0 0.0
        %694 = vmatprep.subr.mxu0 0.0
        %v695 = vand.u32 %v221, 4294901760
        %696 = vmatpush1.msra.mxu0 %v695
        %697 = vmatprep.subr.mxu0 0.0
        %v698 = vand.u32 %v210, 4294901760
        %699 = vmatpush1.msra.mxu0 %v698
        %700 = vmatprep.subr.mxu0 0.0
        %v701 = vand.u32 %v209, 4294901760
        %702 = vmatpush1.msra.mxu0 %v701
        %703 = vmatprep.subr.mxu0 0.0
        %v704 = vand.u32 %v208, 4294901760
        %705 = vmatpush1.msra.mxu0 %v704
        %706 = vmatprep.subr.mxu0 0.0
        %707 = vmatpush2.msra.mxu0 0.0
        %708 = vmatprep.subr.mxu0 0.0
        %709 = vmatpush2.msra.mxu0 0.0
        %710 = vmatprep.subr.mxu0 0.0
        %711 = vmatpush2.msra.mxu0 0.0
        %712 = vmatprep.subr.mxu0 0.0
        %713 = vmatpush2.msra.mxu0 0.0
        %714 = vmatprep.subr.mxu0 0.0
        %715 = vmatpush2.msra.mxu0 0.0
        %716 = vmatprep.subr.mxu0 0.0
        %717 = vmatpush2.msra.mxu0 0.0
        %718 = vmatprep.subr.mxu0 0.0
        %719 = vmatpush2.msra.mxu0 0.0
        %720 = vmatprep.subr.mxu0 0.0
        %721 = vmatpush2.msra.mxu0 0.0
        %722 = vmatprep.subr.mxu0 0.0
        %723 = vmatpush2.msra.mxu0 0.0
        %724 = vmatprep.subr.mxu0 0.0
        %725 = vmatpush2.msra.mxu0 0.0
        %726 = vmatprep.subr.mxu0 0.0
        %727 = vmatpush2.msra.mxu0 0.0
        %728 = vmatprep.subr.mxu0 0.0
        %729 = vmatpush2.msra.mxu0 0.0
        %730 = vmatprep.subr.mxu0 0.0
        %731 = vmatpush2.msra.mxu0 0.0
        %732 = vmatprep.subr.mxu0 0.0
        %733 = vmatpush2.msra.mxu0 0.0
        %734 = vmatprep.subr.mxu0 0.0
        %735 = vmatpush2.msra.mxu0 0.0
        %736 = vmatprep.subr.mxu0 0.0
        %737 = vmatpush2.msra.mxu0 0.0
        %738 = vmatprep.mubr.f32.mxu0 0.0
        %v739 = vand.u32 %v214, 4294901760
        %740 = vmatmul.mubr.f32.gmra.mxu0 %v739
        %v741 = vpop.f32.mrf.mxu0
        %v742 = vadd.f32 %v661, %v741
        %v743 = vpop.f32.mrf.mxu0
        %744 = vmatprep.mubr.f32.mxu0 0.0
        %v745 = vand.u32 %v217, 4294901760
        %746 = vmatmul.mubr.f32.gmra.mxu0 %v745
        %v747 = vpop.f32.mrf.mxu0
        %v748 = vadd.f32 %v667, %v747
        %v749 = vpop.f32.mrf.mxu0
        %750 = vdwg.mxu0
        %v751 = vld [vmem:[%s205] sm:$0xff]
        %753 = vrot.lane.b32.xlu0 %v748, 32
        %v754 = vpop.permute.xlu0 %753
        %757 = vrot.lane.b32.xlu0 %v751, 64
        %v758 = vpop.permute.xlu0 %757
        %vm760 = vcmask 261120
        %v761 = vsel %vm760, %v742, %v754
        %vm762 = vcmask 523264
        %v763 = vsel %vm762, %v761, %v758
        %764 = vst [vmem:[%s191] sm:$0xff] %v763
        %s765 = sand.u32 %s103, 1
        %s766 = scalar_lea.sflag [#allocation3], %s765
        %s767 = sand.u32 %s103, 1
        %s768 = smul.addr %s767, 8
        %s769 = scalar_lea.vmem [#allocation2], %s768
        // Predicated region
        $region33: #{tpu_custom_call.1} parent=31 // pred_check
          %p770 = pneg %p113
        $region34: #{tpu_custom_call.1} parent=31 // pred_check_branch
          %772 = sbr.rel (%p770) target = $region36
        $region35: #{tpu_custom_call.1} parent=31 // pred_region
          %s774 = ssub.s32 128, 128
          %775 = vsyncadd %s766, %s774
          %s776 = smul.addr %s17, 128
          %s777 = scalar_lea.hbm %s3, %s776
          %s779 = sshll.u32 %s769, 4
          %s780 = int_to_ptr.vmem [resolvable:$true] %s779
          %782 = dma.vmem_to_hbm [thread:$0]  %s780, 128, %s777, %s766
        $region36: #{tpu_custom_call.1} parent=31 // pred_fallthru
          _
      $region32: #{tpu_custom_call.1} parent=5 // pred_fallthru
        _
      %p783 = scmp.le.s32.totalorder 2, %s12
      // Predicated region
      $region37: #{tpu_custom_call.1} parent=5 // pred_check
        %p784 = pneg %p783
      $region38: #{tpu_custom_call.1} parent=5 // pred_check_branch
        %786 = sbr.rel (%p784) target = $region40
      $region39: #{tpu_custom_call.1} parent=5 // pred_region
        %s787 = ssub.s32 %s12, 2
        // Predicated region
        $region41: #{tpu_custom_call.1} parent=39 // pred_check
          %p788 = pneg %p119
        $region42: #{tpu_custom_call.1} parent=39 // pred_check_branch
          %790 = sbr.rel (%p788) target = $region44
        $region43: #{tpu_custom_call.1} parent=39 // pred_region
          %s791 = sand.u32 %s104, 1
          %s792 = scalar_lea.sflag [#allocation3], %s791
          %s793 = sand.u32 %s104, 1
          %s794 = smul.addr %s793, 8
          %s795 = scalar_lea.vmem [#allocation2], %s794
          %796 = dma.done %s792, 128
        $region44: #{tpu_custom_call.1} parent=39 // pred_fallthru
          _
      $region40: #{tpu_custom_call.1} parent=5 // pred_fallthru
        _
    $region6: #{tpu_custom_call.1} parent=1 // loop_footer
      %s16 = sadd.s32 1, %s12
    $region7: #{tpu_custom_call.1} parent=1 // loop_footer_branch
      %11 = sbr.rel target = $region3
    $region8: #{tpu_custom_call.1} parent=1 // loop_exit
      _
    %797 = vsyncpa [#allocation3], 1
    %s798 = scalar_lea.sflag [#allocation3], 1
    %799 = vsyncpa %s798, 1

</llo_original>
